<compile_context>
chip_gen: v6e
topology: v6e:2x2x1
jax: 0.10.0
libtpu: 0.0.40
codegen_flags: <defaults>
</compile_context>

<pallas_src>
import functools

import jax
import jax.numpy as jnp
from jax.experimental import pallas as pl
from jax.experimental.pallas import tpu as pltpu


def _cdiv(a, b):
    return (a + b - 1) // b


def _round_up(x, m):
    return ((x + m - 1) // m) * m


def _device_defaults():
    """(tile_rows, num_parallel) tuned per TPU generation."""
    try:
        kind = jax.devices()[0].device_kind.lower()
    except Exception:  # pragma: no cover - defensive
        kind = ""
    if "v7" in kind:
        return 8192, 2   # 2 TCs, ~3.2 TB/s HBM: big blocks + parallel split
    if "v6" in kind:
        return 8192, 1   # 32 MiB scoped VMEM default; single TC
    if "v5" in kind:
        return 4096, 1   # 16 MiB scoped VMEM default; single TC
    return 4096, 1


def _sumsq_kernel(yhat_ref, y_ref, o_ref, acc_ref, *,
                  acc_rows, tiles_per_slice, valid_rows, need_mask):
    """Accumulates sum((yhat - y)^2) along the inner ('arbitrary') grid axis.

    Each outer ('parallel') slice writes its whole (acc_rows, 128) accumulator;
    the tiny cross-sublane/lane reduce + mean + sqrt happen in the wrapper.
    """
    s = pl.program_id(0)
    t = pl.program_id(1)

    @pl.when(t == 0)
    def _():
        acc_ref[...] = jnp.zeros_like(acc_ref)

    a = yhat_ref[...]
    b = y_ref[...]
    if a.dtype != jnp.float32:          # trace-time branch; no-op for f32 inputs
        a = a.astype(jnp.float32)
        b = b.astype(jnp.float32)
    d = a - b

    tr, lanes = d.shape
    if need_mask:
        # Rows at/after `valid_rows` are either the undefined tail of a partial
        # last block or belong to a fully out-of-range (clamped) overhang tile
        # on the last slice: zero them before squaring.
        logical_tile = s * tiles_per_slice + t
        start_row = logical_tile * tr
        row_idx = jax.lax.broadcasted_iota(jnp.int32, (tr, lanes), 0) + start_row
        d = jnp.where(row_idx < valid_rows, d, 0.0)

    sq = d * d
    # acc_rows/8 independent vreg accumulators keep several VALU add-chains in
    # flight; the reshape splits the sublane dim on 8-row boundaries (layout
    # no-op on (8,128) tiles).
    acc_ref[...] += jnp.sum(sq.reshape(tr // acc_rows, acc_rows, lanes), axis=0)

    @pl.when(t == pl.num_programs(1) - 1)
    def _():
        o_ref[...] = acc_ref[...]       # unmasked, (8,128)-aligned store


@functools.partial(jax.jit, static_argnames=("tile_rows", "num_parallel", "lanes"))
def rmse_loss(yhat, y, *, tile_rows=None, num_parallel=None, lanes=128):
    assert yhat.shape == y.shape, "yhat and y must have the same shape"
    if y.dtype != yhat.dtype:
        y = y.astype(yhat.dtype)

    n_elems = yhat.size                 # true divisor for the mean
    out_dtype = yhat.dtype

    dflt_tr, dflt_p = _device_defaults()
    if tile_rows is None:
        tile_rows = dflt_tr
    if num_parallel is None:
        num_parallel = dflt_p
    tile_rows = int(tile_rows)
    p = max(1, int(num_parallel))

    yh = jnp.ravel(yhat)
    yy = jnp.ravel(y)

    # Lane-dense slab.  Only a sub-128-element pad (needed to reshape a ragged
    # size at all) is ever materialized; no rounding to whole tiles/slices.
    rows = _cdiv(n_elems, lanes)
    pad = rows * lanes - n_elems
    if pad:
        yh = jnp.pad(yh, (0, pad))
        yy = jnp.pad(yy, (0, pad))
    yh2 = yh.reshape(rows, lanes)
    yy2 = yy.reshape(rows, lanes)

    # Row tile: single full-extent tile if everything fits, else a large
    # multiple-of-16 tile (valid for both f32 8-row and bf16 16-row packing).
    if tile_rows >= rows:
        tr = rows
    else:
        tr = max(16, (tile_rows // 16) * 16)

    total_tiles = _cdiv(rows, tr)
    p = min(p, total_tiles)
    tiles_per_slice = _cdiv(total_tiles, p)

    # Accumulator width: widest of 32/16/8 sublanes that divides the tile
    # (up to 4 independent vreg chains).  Tiny single-tile slabs fall back to
    # the full extent (legal because p == 1 there).
    acc_rows = None
    for cand in (32, 16, 8):
        if tr % cand == 0:
            acc_rows = cand
            break
    if acc_rows is None:
        acc_rows = tr

    need_mask = (rows % tr != 0) or (p * tiles_per_slice != total_tiles)
    last_tile = total_tiles - 1

    def in_map(s, t):
        # Clamp so an overhang tile on the last slice (fully masked in-kernel)
        # never produces an out-of-range block index.
        return (jnp.minimum(s * tiles_per_slice + t, last_tile), 0)

    kernel = functools.partial(
        _sumsq_kernel,
        acc_rows=acc_rows,
        tiles_per_slice=tiles_per_slice,
        valid_rows=rows,
        need_mask=need_mask,
    )

    itemsize = jnp.dtype(yhat.dtype).itemsize
    # 2 inputs x 2 pipeline buffers per block + accumulator/output slack.
    vmem_needed = 2 * 2 * tr * lanes * itemsize + 8 * acc_rows * lanes * 4
    vmem_limit = min(100 * 1024 * 1024,
                     max(32 * 1024 * 1024, int(vmem_needed * 1.5)))

    partials = pl.pallas_call(
        kernel,
        out_shape=jax.ShapeDtypeStruct((p * acc_rows, lanes), jnp.float32),
        grid_spec=pltpu.PrefetchScalarGridSpec(
            num_scalar_prefetch=0,
            grid=(p, tiles_per_slice),
            in_specs=[
                pl.BlockSpec((tr, lanes), in_map),
                pl.BlockSpec((tr, lanes), in_map),
            ],
            out_specs=pl.BlockSpec((acc_rows, lanes), lambda s, t: (s, 0)),
            scratch_shapes=[pltpu.VMEM((acc_rows, lanes), jnp.float32)],
        ),
        compiler_params=pltpu.CompilerParams(
            dimension_semantics=("parallel", "arbitrary"),
            vmem_limit_bytes=vmem_limit,
        ),
    )(yh2, yy2)

    # Tiny final reduction + mean + sqrt (fused by XLA under jit).
    ssq = jnp.sum(partials)
    return jnp.sqrt(ssq / jnp.float32(n_elems)).astype(out_dtype)


if __name__ == "__main__":
    key = jax.random.PRNGKey(0)
    k1, k2 = jax.random.split(key)

    # Small shapes consistent with a CNN regression head: (batch, C, H, W)
    yhat = jax.random.normal(k1, (2, 4, 16, 16), dtype=jnp.float32)
    y = jax.random.normal(k2, (2, 4, 16, 16), dtype=jnp.float32)

    loss = rmse_loss(yhat, y)
    jax.block_until_ready(loss)
    ref = jnp.sqrt(jnp.mean((yhat - y) ** 2))
    assert jnp.allclose(loss, ref, rtol=1e-5, atol=1e-6), (loss, ref)

    # Ragged element count (not a multiple of 128): exercises minimal-pad path.
    n = 5000
    a = jax.random.normal(k1, (n,), dtype=jnp.float32)
    b = jax.random.normal(k2, (n,), dtype=jnp.float32)
    loss2 = rmse_loss(a, b)
    jax.block_until_ready(loss2)
    ref2 = jnp.sqrt(jnp.mean((a - b) ** 2))
    assert jnp.allclose(loss2, ref2, rtol=1e-5, atol=1e-6), (loss2, ref2)

    # Force the multi-tile + parallel-slice + tail-mask + clamped-overhang path.
    loss3 = rmse_loss(a, b, tile_rows=16, num_parallel=2)
    jax.block_until_ready(loss3)
    assert jnp.allclose(loss3, ref2, rtol=1e-5, atol=1e-6), (loss3, ref2)

    print("KERNEL_OK")
</pallas_src>

<mosaic_0001>
module attributes {stable_mosaic.version = 11 : i64} {
  func.func @_sumsq_kernel(%arg0: i32, %arg1: i32, %arg2: memref<16x128xf32, #tpu.memory_space<vmem>>, %arg3: memref<16x128xf32, #tpu.memory_space<vmem>>, %arg4: memref<16x128xf32, #tpu.memory_space<vmem>>, %arg5: memref<16x128xf32, #tpu.memory_space<vmem>>) attributes {dimension_semantics = [#tpu.dimension_semantics<parallel>, #tpu.dimension_semantics<arbitrary>], iteration_bounds = array<i64: 1, 1>, scalar_prefetch = 0 : i64, scratch_operands = 1 : i64, tpu.core_type = #tpu.core_type<tc>, window_params = [{transform_indices = @transform_0, window_bounds = array<i64: 16, 128>}, {transform_indices = @transform_1, window_bounds = array<i64: 16, 128>}, {transform_indices = @transform_2, window_bounds = array<i64: 16, 128>}]} {
    %c0_i32 = arith.constant 0 : i32
    %0 = arith.cmpi eq, %arg1, %c0_i32 : i32
    %1 = arith.extui %0 : i1 to i32
    %c0_i32_0 = arith.constant 0 : i32
    %2 = arith.cmpi ne, %1, %c0_i32_0 : i32
    scf.if %2 {
      %cst_10 = arith.constant 0.000000e+00 : f32
      %15 = vector.broadcast %cst_10 : f32 to vector<16x128xf32>
      %c0_11 = arith.constant 0 : index
      %c0_12 = arith.constant 0 : index
      %16 = vector.load %arg5[%c0_11, %c0_12] : memref<16x128xf32, #tpu.memory_space<vmem>>, vector<16x128xf32>
      tpu.vector_store %arg5[%c0_11, %c0_12], %15 {strides = array<i32>} : memref<16x128xf32, #tpu.memory_space<vmem>>, vector<16x128xf32>,
    } else {
    }
    %c0 = arith.constant 0 : index
    %c0_1 = arith.constant 0 : index
    %3 = vector.load %arg2[%c0, %c0_1] : memref<16x128xf32, #tpu.memory_space<vmem>>, vector<16x128xf32>
    %c0_2 = arith.constant 0 : index
    %c0_3 = arith.constant 0 : index
    %4 = vector.load %arg3[%c0_2, %c0_3] : memref<16x128xf32, #tpu.memory_space<vmem>>, vector<16x128xf32>
    %5 = arith.subf %3, %4 : vector<16x128xf32>
    %6 = arith.mulf %5, %5 : vector<16x128xf32>
    %c0_4 = arith.constant 0 : index
    %c0_5 = arith.constant 0 : index
    %7 = vector.load %arg5[%c0_4, %c0_5] : memref<16x128xf32, #tpu.memory_space<vmem>>, vector<16x128xf32>
    %8 = vector.shape_cast %6 : vector<16x128xf32> to vector<1x16x128xf32>
    %cst = arith.constant dense<0.000000e+00> : vector<16x128xf32>
    %9 = vector.multi_reduction <add>, %8, %cst [0] : vector<1x16x128xf32> to vector<16x128xf32>
    %10 = arith.addf %7, %9 : vector<16x128xf32>
    %c0_6 = arith.constant 0 : index
    %c0_7 = arith.constant 0 : index
    %11 = vector.load %arg5[%c0_6, %c0_7] : memref<16x128xf32, #tpu.memory_space<vmem>>, vector<16x128xf32>
    tpu.vector_store %arg5[%c0_6, %c0_7], %10 {strides = array<i32>} : memref<16x128xf32, #tpu.memory_space<vmem>>, vector<16x128xf32>,
    %c0_i32_8 = arith.constant 0 : i32
    %12 = arith.cmpi eq, %arg1, %c0_i32_8 : i32
    %13 = arith.extui %12 : i1 to i32
    %c0_i32_9 = arith.constant 0 : i32
    %14 = arith.cmpi ne, %13, %c0_i32_9 : i32
    scf.if %14 {
      %c0_10 = arith.constant 0 : index
      %c0_11 = arith.constant 0 : index
      %15 = vector.load %arg5[%c0_10, %c0_11] : memref<16x128xf32, #tpu.memory_space<vmem>>, vector<16x128xf32>
      %c0_12 = arith.constant 0 : index
      %c0_13 = arith.constant 0 : index
      %16 = vector.load %arg4[%c0_12, %c0_13] : memref<16x128xf32, #tpu.memory_space<vmem>>, vector<16x128xf32>
      tpu.vector_store %arg4[%c0_12, %c0_13], %15 {strides = array<i32>} : memref<16x128xf32, #tpu.memory_space<vmem>>, vector<16x128xf32>,
    } else {
    }
    return
  }
  func.func @transform_0(%arg0: i32, %arg1: i32) -> (i32, i32) {
    %c1_i32 = arith.constant 1 : i32
    %0 = arith.muli %arg0, %c1_i32 : i32
    %1 = arith.addi %0, %arg1 : i32
    %c0_i32 = arith.constant 0 : i32
    %2 = arith.minsi %1, %c0_i32 : i32
    %c0_i32_0 = arith.constant 0 : i32
    %c0_i32_1 = arith.constant 0 : i32
    return %2, %c0_i32_0 : i32, i32
  }
  func.func @transform_1(%arg0: i32, %arg1: i32) -> (i32, i32) {
    %c1_i32 = arith.constant 1 : i32
    %0 = arith.muli %arg0, %c1_i32 : i32
    %1 = arith.addi %0, %arg1 : i32
    %c0_i32 = arith.constant 0 : i32
    %2 = arith.minsi %1, %c0_i32 : i32
    %c0_i32_0 = arith.constant 0 : i32
    %c0_i32_1 = arith.constant 0 : i32
    return %2, %c0_i32_0 : i32, i32
  }
  func.func @transform_2(%arg0: i32, %arg1: i32) -> (i32, i32) {
    %c0_i32 = arith.constant 0 : i32
    %c0_i32_0 = arith.constant 0 : i32
    return %arg0, %c0_i32 : i32, i32
  }
}

</mosaic_0001>

<llo_original>
// kernel: rmse_loss.1
$region0: #{rmse_loss.1}
  #allocation0 [shape = 'u32[]', space=smem, size = 0x4, offset = 0x4, fixed_abs, tag = 'smem constant byte address 0x4 - core index']
  #allocation1 [shape = 'u32[144,128]{1,0:T(1,128)}', space=vmem, size = 0x12000, scoped, tag = 'internal scratch']
  #allocation2 [shape = 'f32[16,128]{1,0:T(8,128)}', space=vmem, size = 0x2000, scoped, tag = 'scratch operand']
  %s0 = inlined_call_operand.vmem [shape: f32[16,128], index: 0, kind: input, shape index: {}]
  %s1 = inlined_call_operand.vmem [shape: f32[16,128], index: 1, kind: input, shape index: {}]
  %s2 = inlined_call_operand.vmem [shape: f32[16,128], index: 2, kind: output, shape index: {}]
  %s3 = sld [smem:[#allocation0]]
  $region26: #{rmse_loss.1} parent=0
    _
  %s5 = ssub.s32 1, %s3
  %s6 = scalar_select 0, %s5, %s3
  // Predicated region
  $region2: #{rmse_loss.1} parent=0 // pred_check
    _
  $region3: #{rmse_loss.1} parent=0 // pred_check_branch
    %8 = sbr.rel (0) target = $region5
  $region4: #{rmse_loss.1} parent=0 // pred_region
    %s9 = sadd.s32 0, 0
    %p10 = scmp.lt.s32.totalorder %s9, 0
    %s11 = scalar_select %p10, %s9, 0
    %s12 = smul.u32 2, %s11
    %p13 = scmp.lt.s32.totalorder %s12, 1
    %s14 = scalar_select %p13, %s12, 1
    %s15 = smul.addr %s14, 8
    %s16 = scalar_lea.vmem %s0, %s15
    %s17 = sadd.s32 0, 0
    %p18 = scmp.lt.s32.totalorder %s17, 0
    %s19 = scalar_select %p18, %s17, 0
    %s20 = smul.u32 2, %s19
  $region5: #{rmse_loss.1} parent=0 // pred_fallthru
    _
  // Predicated region
  $region6: #{rmse_loss.1} parent=0 // pred_check
    _
  $region7: #{rmse_loss.1} parent=0 // pred_check_branch
    %22 = sbr.rel (0) target = $region9
  $region8: #{rmse_loss.1} parent=0 // pred_region
    %s23 = sadd.s32 0, 0
    %p24 = scmp.lt.s32.totalorder %s23, 0
    %s25 = scalar_select %p24, %s23, 0
    %s26 = smul.u32 2, %s25
    %p27 = scmp.lt.s32.totalorder %s26, 1
    %s28 = scalar_select %p27, %s26, 1
    %s29 = smul.addr %s28, 8
    %s30 = scalar_lea.vmem %s1, %s29
    %s31 = sadd.s32 0, 0
    %p32 = scmp.lt.s32.totalorder %s31, 0
    %s33 = scalar_select %p32, %s31, 0
    %s34 = smul.u32 2, %s33
  $region9: #{rmse_loss.1} parent=0 // pred_fallthru
    _
  %s35 = sadd.s32 0, 0
  %p36 = scmp.lt.s32.totalorder %s35, 0
  %s37 = scalar_select %p36, %s35, 0
  %s38 = smul.u32 2, %s37
  %p39 = scmp.lt.s32.totalorder %s38, 1
  %s40 = scalar_select %p39, %s38, 1
  %s41 = smul.addr %s40, 8
  %s42 = scalar_lea.vmem %s0, %s41
  %s43 = sadd.s32 0, 0
  %p44 = scmp.lt.s32.totalorder %s43, 0
  %s45 = scalar_select %p44, %s43, 0
  %s46 = smul.u32 2, %s45
  %p47 = scmp.lt.s32.totalorder %s46, 1
  %s48 = scalar_select %p47, %s46, 1
  %s49 = smul.addr %s48, 8
  %s50 = scalar_lea.vmem %s1, %s49
  %s51 = sadd.s32 0, 0
  %p52 = scmp.lt.s32.totalorder %s51, 0
  %s53 = scalar_select %p52, %s51, 0
  %s54 = smul.u32 2, %s53
  %p55 = scmp.lt.s32.totalorder %s54, 1
  %s56 = scalar_select %p55, %s54, 1
  %s57 = smul.addr %s56, 8
  %s58 = scalar_lea.vmem %s0, %s57
  %s59 = sadd.s32 0, 0
  %p60 = scmp.lt.s32.totalorder %s59, 0
  %s61 = scalar_select %p60, %s59, 0
  %s62 = smul.u32 2, %s61
  %s63 = sadd.s32 0, 0
  %p64 = scmp.lt.s32.totalorder %s63, 0
  %s65 = scalar_select %p64, %s63, 0
  %s66 = smul.u32 2, %s65
  %p67 = scmp.lt.s32.totalorder %s66, 1
  %s68 = scalar_select %p67, %s66, 1
  %s69 = smul.addr %s68, 8
  %s70 = scalar_lea.vmem %s1, %s69
  %s71 = sadd.s32 0, 0
  %p72 = scmp.lt.s32.totalorder %s71, 0
  %s73 = scalar_select %p72, %s71, 0
  %s74 = smul.u32 2, %s73
  %p75 = scmp.eq.s32.totalorder 0, 0
  // Predicated region
  $region10: #{rmse_loss.1} parent=0 // pred_check
    %p76 = pneg %p75
  $region11: #{rmse_loss.1} parent=0 // pred_check_branch
    %78 = sbr.rel (%p76) target = $region13
  $region12: #{rmse_loss.1} parent=0 // pred_region
    %79 = vst [vmem:[#allocation2] sm:$0xff] 0.0
    %80 = vst [vmem:[#allocation2 + $0x8] sm:$0xff] 0.0
  $region13: #{rmse_loss.1} parent=0 // pred_fallthru
    _
  %v81 = vld [vmem:[%s58] sm:$0xff]
  %v82 = vld [vmem:[%s58 + $0x8] sm:$0xff]
  %v83 = vld [vmem:[%s70] sm:$0xff]
  %v84 = vld [vmem:[%s70 + $0x8] sm:$0xff]
  %v85 = vsub.f32 %v81, %v83
  %v86 = vsub.f32 %v82, %v84
  %v87 = vmul.f32 %v85, %v85
  %v88 = vmul.f32 %v86, %v86
  %v89 = vld [vmem:[#allocation2] sm:$0xff]
  %v90 = vld [vmem:[#allocation2 + $0x8] sm:$0xff]
  %v91 = vadd.f32 %v87, 0.0
  %v92 = vadd.f32 %v88, 0.0
  %v93 = vadd.f32 %v89, %v91
  %v94 = vadd.f32 %v90, %v92
  %95 = vst [vmem:[#allocation2] sm:$0xff] %v93
  %96 = vst [vmem:[#allocation2 + $0x8] sm:$0xff] %v94
  // Predicated region
  $region14: #{rmse_loss.1} parent=0 // pred_check
    %p97 = pneg %p75
  $region15: #{rmse_loss.1} parent=0 // pred_check_branch
    %99 = sbr.rel (%p97) target = $region17
  $region16: #{rmse_loss.1} parent=0 // pred_region
    %v100 = vld [vmem:[#allocation2] sm:$0xff]
    %v101 = vld [vmem:[#allocation2 + $0x8] sm:$0xff]
    %102 = vst [vmem:[%s2] sm:$0xff] %v100
    %103 = vst [vmem:[%s2 + $0x8] sm:$0xff] %v101
  $region17: #{rmse_loss.1} parent=0 // pred_fallthru
    _
  // Predicated region
  $region18: #{rmse_loss.1} parent=0 // pred_check
    _
  $region19: #{rmse_loss.1} parent=0 // pred_check_branch
    %105 = sbr.rel (0) target = $region21
  $region20: #{rmse_loss.1} parent=0 // pred_region
    _
  $region21: #{rmse_loss.1} parent=0 // pred_fallthru
    _
  // Predicated region
  $region22: #{rmse_loss.1} parent=0 // pred_check
    _
  $region23: #{rmse_loss.1} parent=0 // pred_check_branch
    %107 = sbr.rel (0) target = $region25
  $region24: #{rmse_loss.1} parent=0 // pred_region
    _
  $region25: #{rmse_loss.1} parent=0 // pred_fallthru
    _

</llo_original>
